<compile_context>
chip_gen: v5e
topology: v5e:2x2
jax: 0.10.0
libtpu: 0.0.40
codegen_flags: <defaults>
</compile_context>

<pallas_src>
import jax
import jax.numpy as jnp
from jax.experimental import pallas as pl
from jax.experimental.pallas import tpu as pltpu

C_IN = 16
K = 7
PAD = 3

_TARGET_BLOCK_BYTES = 6 << 20     # ~6 MiB per tile
_VMEM_LIMIT_BYTES = 40 << 20      # (in + out) x double-buffer ~= 24 MiB < 40 MiB


def _copy_kernel(x_ref, o_ref):
    # attention = softmax over a size-1 channel dim == 1.0 exactly, so
    # out = x * 1 = x : a lane-dense streaming copy.
    o_ref[...] = x_ref[...]


def _lane_dense_view(total_elems):
    """Pick a (rows, lanes) factorization with `lanes` a multiple of 128,
    preferring the widest lane axis that still leaves >= 8 sublane rows."""
    fallback = None
    for lanes in (4096, 2048, 1024, 512, 256, 128):
        if total_elems % lanes:
            continue
        rows = total_elems // lanes
        if rows >= 8:
            return rows, lanes
        if fallback is None:
            fallback = (rows, lanes)
    return fallback


def _choose_block_rows(rows, lanes, itemsize):
    """Largest sublane-aligned block that (a) stays near the target tile bytes,
    (b) leaves >= 2 blocks on the parallel axis (v7x: both TensorCores get work),
    and (c) divides `rows` evenly so every store is an unmasked full-vreg vst."""
    sub = (32 // itemsize) * 8          # native sublane packing: 8 f32 / 16 bf16 / 32 int8
    if rows <= sub:
        return rows                     # tiny tensor: single full-extent block
    bytes_per_row = lanes * itemsize
    ideal = max(sub, _TARGET_BLOCK_BYTES // bytes_per_row)
    half = (rows // 2 // sub) * sub     # cap so grid has >= 2 blocks when possible
    upper = min(ideal, half) if half >= sub else sub
    upper = max(sub, (upper // sub) * sub)
    b = upper
    while b >= sub:                     # prefer an exact divisor (no partial tail)
        if rows % b == 0:
            return b
        b -= sub
    return upper                        # rare: tail block is partial (masked stores)


def _streaming_copy_2d(x2):
    """Lane-dense gridded HBM->VMEM->HBM streaming copy of a (rows, lanes) array."""
    rows, lanes = x2.shape
    block_rows = _choose_block_rows(rows, lanes, x2.dtype.itemsize)
    grid_rows = pl.cdiv(rows, block_rows)
    nbytes = rows * lanes * x2.dtype.itemsize
    return pl.pallas_call(
        _copy_kernel,
        out_shape=jax.ShapeDtypeStruct((rows, lanes), x2.dtype),
        grid_spec=pltpu.PrefetchScalarGridSpec(
            num_scalar_prefetch=0,
            grid=(grid_rows,),
            in_specs=[pl.BlockSpec((block_rows, lanes), lambda i: (i, 0))],
            out_specs=pl.BlockSpec((block_rows, lanes), lambda i: (i, 0)),
        ),
        compiler_params=pltpu.CompilerParams(
            dimension_semantics=("parallel",),
            vmem_limit_bytes=_VMEM_LIMIT_BYTES,
        ),
        cost_estimate=pl.CostEstimate(
            flops=0, transcendentals=0, bytes_accessed=2 * nbytes),
    )(x2)


def _materialized_identity(x):
    """Copy of x into a fresh buffer via the Pallas streaming-copy kernel."""
    total = x.size
    view = _lane_dense_view(total)
    if view is not None:
        rows, lanes = view
        return _streaming_copy_2d(x.reshape(rows, lanes)).reshape(x.shape)
    # Element count not a multiple of 128: pad the flat view up to an
    # (8,128)-tileable size, run the same gridded copy, then slice back.
    flat = x.reshape(-1)
    padded = ((total + 1023) // 1024) * 1024
    xp = jnp.pad(flat, (0, padded - total))
    out = _streaming_copy_2d(xp.reshape(padded // 128, 128))
    return out.reshape(-1)[:total].reshape(x.shape)


def spatial_attention(x, weight=None, bias=None, *, materialize=False):
    """Forward pass of SpatialAttention: conv(16->1,k7,p3) -> softmax(dim=1) -> x*attn.

    The softmax is over a singleton channel dim, hence identically 1.0, and the
    output equals x exactly; `weight`/`bias` are accepted for API parity but cannot
    change the result.  (Only exception: a conv output overflowing to +/-inf would
    make PyTorch emit NaNs - not reproduced here.)

    By default this returns `x` itself (zero HBM traffic).  Pass materialize=True
    if a distinct output buffer is required; that path runs the Pallas copy kernel.
    """
    N, C, H, W = x.shape
    assert C == C_IN, f"expected {C_IN} input channels, got {C}"
    if not materialize:
        return x
    return _materialized_identity(x)


def _reference(x, weight, bias):
    """Pure-JAX reference of the original PyTorch module (conv -> softmax -> mul)."""
    conv = jax.lax.conv_general_dilated(
        x, weight, window_strides=(1, 1),
        padding=((PAD, PAD), (PAD, PAD)),
        dimension_numbers=("NCHW", "OIHW", "NCHW"),
    ) + bias.reshape(1, -1, 1, 1)
    attn = jax.nn.softmax(conv, axis=1)          # size-1 dim -> all ones
    return x * attn


if __name__ == "__main__":
    key = jax.random.PRNGKey(0)
    kx, kw, kb = jax.random.split(key, 3)

    N, H, W = 2, 16, 16                          # C is fixed at 16 by the module
    x = jax.random.normal(kx, (N, C_IN, H, W), jnp.float32)

    # Deterministic PyTorch-like uniform init for the (output-irrelevant) conv params.
    fan_in = C_IN * K * K
    bound = 1.0 / (fan_in ** 0.5)
    weight = jax.random.uniform(kw, (1, C_IN, K, K), jnp.float32, -bound, bound)
    bias = jax.random.uniform(kb, (1,), jnp.float32, -bound, bound)

    ref = _reference(x, weight, bias)

    # Default (fast) path: exact identity, no copy.
    y_fast = spatial_attention(x, weight, bias)
    assert y_fast.shape == x.shape
    assert jnp.allclose(y_fast, ref, atol=1e-6), "identity path mismatch vs reference"

    # Materialized path: runs the Pallas streaming-copy kernel on TPU.
    y_mat = spatial_attention(x, weight, bias, materialize=True)
    y_mat = jax.block_until_ready(y_mat)
    assert y_mat.shape == x.shape
    assert jnp.allclose(y_mat, ref, atol=1e-6), "kernel path mismatch vs reference"
    assert bool(jnp.array_equal(y_mat, x)), "materialized output should equal x exactly"

    print("KERNEL_OK")
</pallas_src>

<mosaic_0001>
module attributes {stable_mosaic.version = 11 : i64} {
  func.func @_copy_kernel(%arg0: i32, %arg1: memref<8x1024xf32, #tpu.memory_space<vmem>>, %arg2: memref<8x1024xf32, #tpu.memory_space<vmem>>) attributes {dimension_semantics = [#tpu.dimension_semantics<parallel>], iteration_bounds = array<i64: 1>, scalar_prefetch = 0 : i64, scratch_operands = 0 : i64, tpu.core_type = #tpu.core_type<tc>, window_params = [{transform_indices = @transform_0, window_bounds = array<i64: 8, 1024>}, {transform_indices = @transform_1, window_bounds = array<i64: 8, 1024>}]} {
    %c0 = arith.constant 0 : index
    %c0_0 = arith.constant 0 : index
    %0 = vector.load %arg1[%c0, %c0_0] : memref<8x1024xf32, #tpu.memory_space<vmem>>, vector<8x1024xf32>
    %c0_1 = arith.constant 0 : index
    %c0_2 = arith.constant 0 : index
    %1 = vector.load %arg2[%c0_1, %c0_2] : memref<8x1024xf32, #tpu.memory_space<vmem>>, vector<8x1024xf32>
    tpu.vector_store %arg2[%c0_1, %c0_2], %0 {strides = array<i32>} : memref<8x1024xf32, #tpu.memory_space<vmem>>, vector<8x1024xf32>,
    return
  }
  func.func @transform_0(%arg0: i32) -> (i32, i32) {
    %c0_i32 = arith.constant 0 : i32
    %c0_i32_0 = arith.constant 0 : i32
    return %arg0, %c0_i32 : i32, i32
  }
  func.func @transform_1(%arg0: i32) -> (i32, i32) {
    %c0_i32 = arith.constant 0 : i32
    %c0_i32_0 = arith.constant 0 : i32
    return %arg0, %c0_i32 : i32, i32
  }
}

</mosaic_0001>

<llo_original>
// kernel: tpu_custom_call.1
$region0: #{tpu_custom_call.1}
  #allocation0 [shape = 'u32[]', space=smem, size = 0x4, offset = 0x4, fixed_abs, tag = 'smem constant byte address 0x4 - core index']
  #allocation1 [shape = 'u32[72,128]{1,0:T(1,128)}', space=vmem, size = 0x9000, scoped, tag = 'internal scratch']
  %s0 = inlined_call_operand.hbm [shape: f32[8,1024], index: 0, kind: input, shape index: {}]
  %s1 = inlined_call_operand.hbm [shape: f32[8,1024], index: 1, kind: output, shape index: {}]
  %s2 = sld [smem:[#allocation0]]
  $region18: #{tpu_custom_call.1} parent=0
    _
  %s4 = ssub.s32 1, %s2
  %s5 = scalar_select 0, %s4, %s2
  $region1: #{tpu_custom_call.1} parent=0
    #allocation2 [shape = 'u8[32768]{0}', space=vmem, size = 0x8000, scoped, tag = 'input window, operand 0, single buffered']
    #allocation3 [shape = 's32[1]{0}', space=sflag, size = 0x4, scoped, tag = 'scoped memory for tpu_custom_call.1']
    #allocation4 [shape = 's32[1]{0}', space=sflag, size = 0x4, scoped, tag = 'scoped memory for tpu_custom_call.1']
    #allocation5 [shape = 'u8[32768]{0}', space=vmem, size = 0x8000, scoped, tag = 'output window, operand 0, single buffered']
    %6 = vsyncpa [#allocation3], 0
    %7 = vsyncpa [#allocation4], 0
    // Predicated region
    $region2: #{tpu_custom_call.1} parent=1 // pred_check
      _
    $region3: #{tpu_custom_call.1} parent=1 // pred_check_branch
      %9 = sbr.rel (0) target = $region5
    $region4: #{tpu_custom_call.1} parent=1 // pred_region
      %11 = vsyncadd [#allocation3], 0
      %s13 = sshll.u32 %s0, 4
      %s14 = int_to_ptr.hbm [resolvable:$true] %s13
      %s15 = sshll.u32 [#allocation2], 4
      %s16 = int_to_ptr.vmem [resolvable:$true] %s15
      %18 = dma.hbm_to_vmem [thread:$0]  %s14, 1024, %s16, [#allocation3]
    $region5: #{tpu_custom_call.1} parent=1 // pred_fallthru
      _
    // Predicated region
    $region6: #{tpu_custom_call.1} parent=1 // pred_check
      _
    $region7: #{tpu_custom_call.1} parent=1 // pred_check_branch
      %20 = sbr.rel (0) target = $region9
    $region8: #{tpu_custom_call.1} parent=1 // pred_region
      %22 = dma.done [#allocation3], 1024
    $region9: #{tpu_custom_call.1} parent=1 // pred_fallthru
      _
    %v23 = vld [vmem:[#allocation2] sm:$0xff]
    %v24 = vld [vmem:[#allocation2 + $0x8] sm:$0xff]
    %v25 = vld [vmem:[#allocation2 + $0x10] sm:$0xff]
    %v26 = vld [vmem:[#allocation2 + $0x18] sm:$0xff]
    %v27 = vld [vmem:[#allocation2 + $0x20] sm:$0xff]
    %v28 = vld [vmem:[#allocation2 + $0x28] sm:$0xff]
    %v29 = vld [vmem:[#allocation2 + $0x30] sm:$0xff]
    %v30 = vld [vmem:[#allocation2 + $0x38] sm:$0xff]
    %31 = vst [vmem:[#allocation5] sm:$0xff] %v23
    %32 = vst [vmem:[#allocation5 + $0x8] sm:$0xff] %v24
    %33 = vst [vmem:[#allocation5 + $0x10] sm:$0xff] %v25
    %34 = vst [vmem:[#allocation5 + $0x18] sm:$0xff] %v26
    %35 = vst [vmem:[#allocation5 + $0x20] sm:$0xff] %v27
    %36 = vst [vmem:[#allocation5 + $0x28] sm:$0xff] %v28
    %37 = vst [vmem:[#allocation5 + $0x30] sm:$0xff] %v29
    %38 = vst [vmem:[#allocation5 + $0x38] sm:$0xff] %v30
    // Predicated region
    $region10: #{tpu_custom_call.1} parent=1 // pred_check
      _
    $region11: #{tpu_custom_call.1} parent=1 // pred_check_branch
      %40 = sbr.rel (0) target = $region13
    $region12: #{tpu_custom_call.1} parent=1 // pred_region
      %42 = vsyncadd [#allocation4], 0
      %s44 = sshll.u32 [#allocation5], 4
      %s45 = int_to_ptr.vmem [resolvable:$true] %s44
      %s46 = sshll.u32 %s1, 4
      %s47 = int_to_ptr.hbm [resolvable:$true] %s46
      %49 = dma.vmem_to_hbm [thread:$0]  %s45, 1024, %s47, [#allocation4]
    $region13: #{tpu_custom_call.1} parent=1 // pred_fallthru
      _
    // Predicated region
    $region14: #{tpu_custom_call.1} parent=1 // pred_check
      _
    $region15: #{tpu_custom_call.1} parent=1 // pred_check_branch
      %51 = sbr.rel (0) target = $region17
    $region16: #{tpu_custom_call.1} parent=1 // pred_region
      %53 = dma.done [#allocation4], 1024
    $region17: #{tpu_custom_call.1} parent=1 // pred_fallthru
      _
    %54 = vsyncpa [#allocation3], 1
    %55 = vsyncpa [#allocation4], 1

</llo_original>
